<compile_context>
chip_gen: v5e
topology: v5e:2x2
jax: 0.10.0
libtpu: 0.0.40
codegen_flags: <defaults>
</compile_context>

<pallas_src>
import functools

import jax
import jax.numpy as jnp
from jax.experimental import pallas as pl
from jax.experimental.pallas import tpu as pltpu

_LANE = 128


def _pad_to_lane(n):
    return max(_LANE, -(-n // _LANE) * _LANE)


def _make_mlp_kernel(n_layers):
    """Fused MLP body: concat + [Linear -> ReLU -> Dropout(eval)] * n_layers.

    Ref layout (all VMEM-resident, lane-padded to 128):
      force (B,1), i_list (B,1),
      w0_force (1,H0), w0_i (1,H0), b0 (1,H0),            # layer 0, pre-split rows
      (w_l (in_pad,out_pad), b_l (1,out_pad)) for l = 1..n_layers-1,
      out (B, out_pad_last)
    """

    def kernel(*refs):
        force_ref, i_ref = refs[0], refs[1]
        w0f_ref, w0i_ref, b0_ref = refs[2], refs[3], refs[4]
        o_ref = refs[-1]

        # Layer 0 (in_features == 2): the torch.cat is fused away -- the two
        # (B, 1) inputs are consumed directly via two broadcast FMAs on the VPU
        # against pre-split (1, H0) weight rows (no MXU push for a K=2
        # contraction, no in-kernel sublane slice).
        f = force_ref[...].astype(jnp.float32)            # (B, 1)
        c = i_ref[...].astype(jnp.float32)                # (B, 1)
        h = f * w0f_ref[...] + c * w0i_ref[...] + b0_ref[...]
        h = jnp.maximum(h, 0.0)                           # ReLU

        # Layers 1..n-1: full 128-lane-padded MXU matmul (f32 acc) + bias/ReLU.
        for layer in range(1, n_layers):
            w = refs[5 + 2 * (layer - 1)][...]            # (in_pad, out_pad)
            b = refs[6 + 2 * (layer - 1)][...]            # (1, out_pad)
            h = jnp.dot(h, w, preferred_element_type=jnp.float32) + b
            h = jnp.maximum(h, 0.0)                       # ReLU
        # Dropout: identity in eval mode.
        # TODO(synk): training-mode dropout (pltpu.prng_seed +
        # pltpu.prng_random_bits mask with 1/(1-p) rescale) not emitted.

        o_ref[...] = h.astype(o_ref.dtype)

    return kernel


def prepare_params(params):
    """Re-pack PyTorch-style Linear params for the fused kernel.

     * Every layer's output (and the next layer's input) is zero-padded to a
       multiple of 128 lanes: full (8,128)/(128,128) tiles everywhere and a
       lane-dense (unmasked) output store.  Padded lanes stay exactly 0
       through bias(0) + ReLU, so the math is unchanged.
     * The (2, H0) layer-0 weight is split into its two rows host-side.

    Weights are (in_features, out_features): y = x @ W + b.
    Returns (packed_operands, out_features, padded_out).  Call once, reuse.
    """
    n_layers = len(params)
    packed = []

    w0, b0 = params[0]
    h0 = w0.shape[1]
    h0_pad = _pad_to_lane(h0)
    pad0 = h0_pad - h0
    packed.append(jnp.pad(w0[0:1, :], ((0, 0), (0, pad0))))   # force row
    packed.append(jnp.pad(w0[1:2, :], ((0, 0), (0, pad0))))   # I_list row
    packed.append(jnp.pad(b0, ((0, 0), (0, pad0))))

    in_feat, in_pad = h0, h0_pad
    out_features, padded_out = h0, h0_pad
    for layer in range(1, n_layers):
        w, b = params[layer]
        out_feat = w.shape[1]
        out_pad = _pad_to_lane(out_feat)
        packed.append(
            jnp.pad(w, ((0, in_pad - in_feat), (0, out_pad - out_feat))))
        packed.append(jnp.pad(b, ((0, 0), (0, out_pad - out_feat))))
        in_feat, in_pad = out_feat, out_pad
        out_features, padded_out = out_feat, out_pad

    return packed, out_features, padded_out


def neural_net_forward(force, i_list, packed_params, *, padded_out):
    """Single-shot forward (eval mode), one kernel invocation, no grid.

    Returns the LANE-PADDED (B, padded_out) output; downstream consumers can
    use it as-is (padded lanes are exactly zero) -- slicing to out_features is
    left to the caller to avoid an extra per-call XLA op on this
    latency-bound path."""
    n_layers = (len(packed_params) - 1) // 2
    B = force.shape[0]
    operands = [force, i_list, *packed_params]

    vmem = pl.BlockSpec(memory_space=pltpu.MemorySpace.VMEM)
    return pl.pallas_call(
        _make_mlp_kernel(n_layers),
        out_shape=jax.ShapeDtypeStruct((B, padded_out), jnp.float32),
        in_specs=[vmem] * len(operands),
        out_specs=vmem,
    )(*operands)


def neural_net_forward_rollout(force_seq, i_seq, packed_params, *, padded_out):
    """Many forwards in ONE pallas_call: grid over the leading timestep axis.

    Weights/biases use index_map `lambda t: (0, 0)` so Pallas DMAs them
    HBM->VMEM once and keeps them resident for all T grid steps; the per-call
    launch + weight-DMA cost is amortized across the whole rollout."""
    n_layers = (len(packed_params) - 1) // 2
    T, B, _ = force_seq.shape

    in_specs = [
        pl.BlockSpec((None, B, 1), lambda t: (t, 0, 0)),      # force[t]
        pl.BlockSpec((None, B, 1), lambda t: (t, 0, 0)),      # I_list[t]
    ]
    for p in packed_params:                                   # weights: resident
        in_specs.append(pl.BlockSpec(p.shape, lambda t: (0, 0)))
    out_specs = pl.BlockSpec((None, B, padded_out), lambda t: (t, 0, 0))

    return pl.pallas_call(
        _make_mlp_kernel(n_layers),
        out_shape=jax.ShapeDtypeStruct((T, B, padded_out), jnp.float32),
        grid=(T,),
        in_specs=in_specs,
        out_specs=out_specs,
        compiler_params=pltpu.CompilerParams(
            dimension_semantics=("arbitrary",)),
    )(force_seq, i_seq, *packed_params)


def init_params(key, layer_sizes, in_features=2):
    """PyTorch nn.Linear-style init: U(-1/sqrt(fan_in), 1/sqrt(fan_in)).

    Weights stored (in_features, out_features): y = x @ W + b."""
    params = []
    for out_features in layer_sizes:
        key, kw, kb = jax.random.split(key, 3)
        bound = 1.0 / (in_features ** 0.5)
        w = jax.random.uniform(
            kw, (in_features, out_features), jnp.float32, -bound, bound)
        b = jax.random.uniform(
            kb, (1, out_features), jnp.float32, -bound, bound)
        params.append((w, b))
        in_features = out_features
    return params


if __name__ == "__main__":
    key = jax.random.PRNGKey(0)
    k_params, k_force, k_i, k_seq = jax.random.split(key, 4)

    layer_sizes = [32, 32, 8]
    B, T = 8, 4

    params = init_params(k_params, layer_sizes, in_features=2)
    force = jax.random.normal(k_force, (B, 1), jnp.float32)
    i_list = jax.random.normal(k_i, (B, 1), jnp.float32)
    force_seq = jax.random.normal(k_seq, (T, B, 1), jnp.float32)
    i_seq = jax.random.normal(jax.random.fold_in(k_seq, 1), (T, B, 1),
                              jnp.float32)

    packed, out_features, padded_out = prepare_params(params)

    # Pure-JAX reference of the same forward pass (eval-mode dropout = identity).
    def reference(f, c):
        a = jnp.concatenate([f, c], axis=1)
        for (w, b) in params:
            a = jnp.maximum(a @ w + b, 0.0)
        return a

    # --- single-shot forward (no grid, everything VMEM-resident) ---
    fwd = jax.jit(functools.partial(neural_net_forward, padded_out=padded_out))
    pred_padded = fwd(force, i_list, packed)
    jax.block_until_ready(pred_padded)
    pred = pred_padded[:, :out_features]      # narrow view only for the check
    ref = reference(force, i_list)
    assert pred.shape == (B, layer_sizes[-1])
    assert jnp.allclose(pred, ref, atol=1e-5, rtol=1e-5)
    assert jnp.all(pred_padded[:, out_features:] == 0.0)   # padding stays exact

    # --- rollout: T timesteps in one launch, weights DMA'd once ---
    fwd_roll = jax.jit(
        functools.partial(neural_net_forward_rollout, padded_out=padded_out))
    roll_padded = fwd_roll(force_seq, i_seq, packed)
    jax.block_until_ready(roll_padded)
    roll = roll_padded[:, :, :out_features]
    ref_roll = jax.vmap(reference)(force_seq, i_seq)
    assert roll.shape == (T, B, layer_sizes[-1])
    assert jnp.allclose(roll, ref_roll, atol=1e-5, rtol=1e-5)

    print("KERNEL_OK")
</pallas_src>

<mosaic_0001>
module attributes {stable_mosaic.version = 11 : i64} {
  func.func @kernel(%arg0: memref<8x1xf32, #tpu.memory_space<vmem>>, %arg1: memref<8x1xf32, #tpu.memory_space<vmem>>, %arg2: memref<1x128xf32, #tpu.memory_space<vmem>>, %arg3: memref<1x128xf32, #tpu.memory_space<vmem>>, %arg4: memref<1x128xf32, #tpu.memory_space<vmem>>, %arg5: memref<128x128xf32, #tpu.memory_space<vmem>>, %arg6: memref<1x128xf32, #tpu.memory_space<vmem>>, %arg7: memref<128x128xf32, #tpu.memory_space<vmem>>, %arg8: memref<1x128xf32, #tpu.memory_space<vmem>>, %arg9: memref<8x128xf32, #tpu.memory_space<vmem>>) attributes {dimension_semantics = [], scalar_prefetch = 0 : i64, scratch_operands = 0 : i64, tpu.core_type = #tpu.core_type<tc>} {
    %c0 = arith.constant 0 : index
    %c0_0 = arith.constant 0 : index
    %0 = vector.load %arg0[%c0, %c0_0] : memref<8x1xf32, #tpu.memory_space<vmem>>, vector<8x1xf32>
    %c0_1 = arith.constant 0 : index
    %c0_2 = arith.constant 0 : index
    %1 = vector.load %arg1[%c0_1, %c0_2] : memref<8x1xf32, #tpu.memory_space<vmem>>, vector<8x1xf32>
    %c0_3 = arith.constant 0 : index
    %c0_4 = arith.constant 0 : index
    %2 = vector.load %arg2[%c0_3, %c0_4] : memref<1x128xf32, #tpu.memory_space<vmem>>, vector<1x128xf32>
    %3 = vector.broadcast %0 : vector<8x1xf32> to vector<8x128xf32>
    %4 = vector.broadcast %2 : vector<1x128xf32> to vector<8x128xf32>
    %5 = arith.mulf %3, %4 : vector<8x128xf32>
    %c0_5 = arith.constant 0 : index
    %c0_6 = arith.constant 0 : index
    %6 = vector.load %arg3[%c0_5, %c0_6] : memref<1x128xf32, #tpu.memory_space<vmem>>, vector<1x128xf32>
    %7 = vector.broadcast %1 : vector<8x1xf32> to vector<8x128xf32>
    %8 = vector.broadcast %6 : vector<1x128xf32> to vector<8x128xf32>
    %9 = arith.mulf %7, %8 : vector<8x128xf32>
    %10 = arith.addf %5, %9 : vector<8x128xf32>
    %c0_7 = arith.constant 0 : index
    %c0_8 = arith.constant 0 : index
    %11 = vector.load %arg4[%c0_7, %c0_8] : memref<1x128xf32, #tpu.memory_space<vmem>>, vector<1x128xf32>
    %12 = vector.broadcast %11 : vector<1x128xf32> to vector<8x128xf32>
    %13 = arith.addf %10, %12 : vector<8x128xf32>
    %cst = arith.constant 0.000000e+00 : f32
    %14 = vector.broadcast %cst : f32 to vector<8x128xf32>
    %15 = arith.maximumf %13, %14 : vector<8x128xf32>
    %c0_9 = arith.constant 0 : index
    %c0_10 = arith.constant 0 : index
    %16 = vector.load %arg5[%c0_9, %c0_10] : memref<128x128xf32, #tpu.memory_space<vmem>>, vector<128x128xf32>
    %c0_11 = arith.constant 0 : index
    %c0_12 = arith.constant 0 : index
    %17 = vector.load %arg6[%c0_11, %c0_12] : memref<1x128xf32, #tpu.memory_space<vmem>>, vector<1x128xf32>
    %cst_13 = arith.constant dense<0.000000e+00> : vector<8x128xf32>
    %18 = tpu.matmul %15, %16, %cst_13 {dimension_numbers = #tpu.dot_dimension_numbers<[1], [0], [0], [1], [0, 0, 1, 1], [], []>} : vector<8x128xf32>, vector<128x128xf32>, vector<8x128xf32> -> vector<8x128xf32>
    %19 = vector.broadcast %17 : vector<1x128xf32> to vector<8x128xf32>
    %20 = arith.addf %18, %19 : vector<8x128xf32>
    %cst_14 = arith.constant 0.000000e+00 : f32
    %21 = vector.broadcast %cst_14 : f32 to vector<8x128xf32>
    %22 = arith.maximumf %20, %21 : vector<8x128xf32>
    %c0_15 = arith.constant 0 : index
    %c0_16 = arith.constant 0 : index
    %23 = vector.load %arg7[%c0_15, %c0_16] : memref<128x128xf32, #tpu.memory_space<vmem>>, vector<128x128xf32>
    %c0_17 = arith.constant 0 : index
    %c0_18 = arith.constant 0 : index
    %24 = vector.load %arg8[%c0_17, %c0_18] : memref<1x128xf32, #tpu.memory_space<vmem>>, vector<1x128xf32>
    %cst_19 = arith.constant dense<0.000000e+00> : vector<8x128xf32>
    %25 = tpu.matmul %22, %23, %cst_19 {dimension_numbers = #tpu.dot_dimension_numbers<[1], [0], [0], [1], [0, 0, 1, 1], [], []>} : vector<8x128xf32>, vector<128x128xf32>, vector<8x128xf32> -> vector<8x128xf32>
    %26 = vector.broadcast %24 : vector<1x128xf32> to vector<8x128xf32>
    %27 = arith.addf %25, %26 : vector<8x128xf32>
    %cst_20 = arith.constant 0.000000e+00 : f32
    %28 = vector.broadcast %cst_20 : f32 to vector<8x128xf32>
    %29 = arith.maximumf %27, %28 : vector<8x128xf32>
    %c0_21 = arith.constant 0 : index
    %c0_22 = arith.constant 0 : index
    %30 = vector.load %arg9[%c0_21, %c0_22] : memref<8x128xf32, #tpu.memory_space<vmem>>, vector<8x128xf32>
    tpu.vector_store %arg9[%c0_21, %c0_22], %29 {strides = array<i32>} : memref<8x128xf32, #tpu.memory_space<vmem>>, vector<8x128xf32>,
    return
  }
}

</mosaic_0001>

<llo_original>
// kernel: neural_net_forward.1
$region0: #{neural_net_forward.1}
  #allocation0 [shape = 'u32[]', space=smem, size = 0x4, offset = 0x4, fixed_abs, tag = 'smem constant byte address 0x4 - core index']
  #allocation1 [shape = 'u32[72,128]{1,0:T(1,128)}', space=vmem, size = 0x9000, scoped, tag = 'internal scratch']
  %s0 = inlined_call_operand.vmem [shape: f32[8,1], index: 0, kind: input, shape index: {}]
  %s1 = inlined_call_operand.vmem [shape: f32[8,1], index: 1, kind: input, shape index: {}]
  %s2 = inlined_call_operand.vmem [shape: f32[1,128], index: 2, kind: input, shape index: {}]
  %s3 = inlined_call_operand.vmem [shape: f32[1,128], index: 3, kind: input, shape index: {}]
  %s4 = inlined_call_operand.vmem [shape: f32[1,128], index: 4, kind: input, shape index: {}]
  %s5 = inlined_call_operand.hbm [shape: f32[128,128], index: 5, kind: input, shape index: {}]
  %s6 = inlined_call_operand.vmem [shape: f32[1,128], index: 6, kind: input, shape index: {}]
  %s7 = inlined_call_operand.hbm [shape: f32[128,128], index: 7, kind: input, shape index: {}]
  %s8 = inlined_call_operand.vmem [shape: f32[1,128], index: 8, kind: input, shape index: {}]
  %s9 = inlined_call_operand.hbm [shape: f32[8,128], index: 9, kind: output, shape index: {}]
  %s10 = sld [smem:[#allocation0]]
  $region54: #{neural_net_forward.1} parent=0
    _
  %s12 = ssub.s32 1, %s10
  %s13 = scalar_select 0, %s12, %s10
  $region1: #{neural_net_forward.1} parent=0
    #allocation2 [shape = 'u8[65536]{0}', space=vmem, size = 0x10000, scoped, tag = 'input window, operand 5, single buffered']
    #allocation3 [shape = 's32[1]{0}', space=sflag, size = 0x4, scoped, tag = 'scoped memory for neural_net_forward.1']
    #allocation4 [shape = 's32[1]{0}', space=sflag, size = 0x4, scoped, tag = 'scoped memory for neural_net_forward.1']
    #allocation5 [shape = 'u8[65536]{0}', space=vmem, size = 0x10000, scoped, tag = 'input window, operand 7, single buffered']
    #allocation6 [shape = 's32[1]{0}', space=sflag, size = 0x4, scoped, tag = 'scoped memory for neural_net_forward.1']
    #allocation7 [shape = 'u8[4096]{0}', space=vmem, size = 0x1000, scoped, tag = 'output window, operand 0, single buffered']
    %14 = vsyncpa [#allocation3], 0
    %15 = vsyncpa [#allocation6], 0
    %16 = vsyncpa [#allocation4], 0
    // Predicated region
    $region2: #{neural_net_forward.1} parent=1 // pred_check
      _
    $region3: #{neural_net_forward.1} parent=1 // pred_check_branch
      %18 = sbr.rel (0) target = $region5
    $region4: #{neural_net_forward.1} parent=1 // pred_region
      _
    $region5: #{neural_net_forward.1} parent=1 // pred_fallthru
      _
    // Predicated region
    $region6: #{neural_net_forward.1} parent=1 // pred_check
      _
    $region7: #{neural_net_forward.1} parent=1 // pred_check_branch
      %20 = sbr.rel (0) target = $region9
    $region8: #{neural_net_forward.1} parent=1 // pred_region
      _
    $region9: #{neural_net_forward.1} parent=1 // pred_fallthru
      _
    // Predicated region
    $region10: #{neural_net_forward.1} parent=1 // pred_check
      _
    $region11: #{neural_net_forward.1} parent=1 // pred_check_branch
      %22 = sbr.rel (0) target = $region13
    $region12: #{neural_net_forward.1} parent=1 // pred_region
      _
    $region13: #{neural_net_forward.1} parent=1 // pred_fallthru
      _
    // Predicated region
    $region14: #{neural_net_forward.1} parent=1 // pred_check
      _
    $region15: #{neural_net_forward.1} parent=1 // pred_check_branch
      %24 = sbr.rel (0) target = $region17
    $region16: #{neural_net_forward.1} parent=1 // pred_region
      _
    $region17: #{neural_net_forward.1} parent=1 // pred_fallthru
      _
    // Predicated region
    $region18: #{neural_net_forward.1} parent=1 // pred_check
      _
    $region19: #{neural_net_forward.1} parent=1 // pred_check_branch
      %26 = sbr.rel (0) target = $region21
    $region20: #{neural_net_forward.1} parent=1 // pred_region
      _
    $region21: #{neural_net_forward.1} parent=1 // pred_fallthru
      _
    // Predicated region
    $region22: #{neural_net_forward.1} parent=1 // pred_check
      _
    $region23: #{neural_net_forward.1} parent=1 // pred_check_branch
      %28 = sbr.rel (0) target = $region25
    $region24: #{neural_net_forward.1} parent=1 // pred_region
      %30 = vsyncadd [#allocation3], 0
      %s31 = sshll.u32 %s5, 4
      %s32 = int_to_ptr.hbm [resolvable:$true] %s31
      %s33 = sshll.u32 [#allocation2], 4
      %s34 = int_to_ptr.vmem [resolvable:$true] %s33
      %39 = dma.hbm_to_vmem [thread:$0]  %s32, 2048, %s34, [#allocation3], 128, 128, 8
    $region25: #{neural_net_forward.1} parent=1 // pred_fallthru
      _
    // Predicated region
    $region26: #{neural_net_forward.1} parent=1 // pred_check
      _
    $region27: #{neural_net_forward.1} parent=1 // pred_check_branch
      %41 = sbr.rel (0) target = $region29
    $region28: #{neural_net_forward.1} parent=1 // pred_region
      _
    $region29: #{neural_net_forward.1} parent=1 // pred_fallthru
      _
    // Predicated region
    $region30: #{neural_net_forward.1} parent=1 // pred_check
      _
    $region31: #{neural_net_forward.1} parent=1 // pred_check_branch
      %43 = sbr.rel (0) target = $region33
    $region32: #{neural_net_forward.1} parent=1 // pred_region
      %45 = vsyncadd [#allocation6], 0
      %s46 = sshll.u32 %s7, 4
      %s47 = int_to_ptr.hbm [resolvable:$true] %s46
      %s48 = sshll.u32 [#allocation5], 4
      %s49 = int_to_ptr.vmem [resolvable:$true] %s48
      %54 = dma.hbm_to_vmem [thread:$0]  %s47, 2048, %s49, [#allocation6], 128, 128, 8
    $region33: #{neural_net_forward.1} parent=1 // pred_fallthru
      _
    // Predicated region
    $region34: #{neural_net_forward.1} parent=1 // pred_check
      _
    $region35: #{neural_net_forward.1} parent=1 // pred_check_branch
      %56 = sbr.rel (0) target = $region37
    $region36: #{neural_net_forward.1} parent=1 // pred_region
      _
    $region37: #{neural_net_forward.1} parent=1 // pred_fallthru
      _
    // Predicated region
    $region38: #{neural_net_forward.1} parent=1 // pred_check
      _
    $region39: #{neural_net_forward.1} parent=1 // pred_check_branch
      %58 = sbr.rel (0) target = $region41
    $region40: #{neural_net_forward.1} parent=1 // pred_region
      %60 = dma.done [#allocation3], 2048
    $region41: #{neural_net_forward.1} parent=1 // pred_fallthru
      _
    // Predicated region
    $region42: #{neural_net_forward.1} parent=1 // pred_check
      _
    $region43: #{neural_net_forward.1} parent=1 // pred_check_branch
      %62 = sbr.rel (0) target = $region45
    $region44: #{neural_net_forward.1} parent=1 // pred_region
      %64 = dma.done [#allocation6], 2048
    $region45: #{neural_net_forward.1} parent=1 // pred_fallthru
      _
    %v65 = vld [vmem:[%s0] sm:$0xff]
    %v66 = vld [vmem:[%s1] sm:$0xff]
    %v67 = vld [vmem:[%s2] sm:$0x1]
    %69 = vset.pattern.permute.xlu0 0
    %70 = vperm.xlu0 %69, %v65
    %v71 = vpop.permute.xlu0 %70
    %v74 = vperm.slane %v67, 0
    %v76 = vmul.f32 %v71, %v74
    %v77 = vld [vmem:[%s3] sm:$0x1]
    %79 = vset.pattern.permute.xlu0 0
    %80 = vperm.xlu0 %79, %v66
    %v81 = vpop.permute.xlu0 %80
    %v84 = vperm.slane %v77, 0
    %v86 = vmul.f32 %v81, %v84
    %v87 = vadd.f32 %v76, %v86
    %v88 = vld [vmem:[%s4] sm:$0x1]
    %v90 = vperm.slane %v88, 0
    %v92 = vadd.f32 %v87, %v90
    %v93 = vmax.f32 %v92, 0.0
    %v94 = vld [vmem:[#allocation2] sm:$0xff]
    %v95 = vld [vmem:[#allocation2 + $0x8] sm:$0xff]
    %v96 = vld [vmem:[#allocation2 + $0x10] sm:$0xff]
    %v97 = vld [vmem:[#allocation2 + $0x18] sm:$0xff]
    %v98 = vld [vmem:[#allocation2 + $0x20] sm:$0xff]
    %v99 = vld [vmem:[#allocation2 + $0x28] sm:$0xff]
    %v100 = vld [vmem:[#allocation2 + $0x30] sm:$0xff]
    %v101 = vld [vmem:[#allocation2 + $0x38] sm:$0xff]
    %v102 = vld [vmem:[#allocation2 + $0x40] sm:$0xff]
    %v103 = vld [vmem:[#allocation2 + $0x48] sm:$0xff]
    %v104 = vld [vmem:[#allocation2 + $0x50] sm:$0xff]
    %v105 = vld [vmem:[#allocation2 + $0x58] sm:$0xff]
    %v106 = vld [vmem:[#allocation2 + $0x60] sm:$0xff]
    %v107 = vld [vmem:[#allocation2 + $0x68] sm:$0xff]
    %v108 = vld [vmem:[#allocation2 + $0x70] sm:$0xff]
    %v109 = vld [vmem:[#allocation2 + $0x78] sm:$0xff]
    %v110 = vld [vmem:[%s6] sm:$0x1]
    %v112 = vperm.slane %v110, 0
    %114 = vmatpush.msra.mxu0 %v109
    %115 = vmatpush.msra.mxu0 %v108
    %116 = vmatpush.msra.mxu0 %v107
    %117 = vmatpush.msra.mxu0 %v106
    %118 = vmatpush.msra.mxu0 %v105
    %119 = vmatpush.msra.mxu0 %v104
    %120 = vmatpush.msra.mxu0 %v103
    %121 = vmatpush.msra.mxu0 %v102
    %122 = vmatpush.msra.mxu0 %v101
    %123 = vmatpush.msra.mxu0 %v100
    %124 = vmatpush.msra.mxu0 %v99
    %125 = vmatpush.msra.mxu0 %v98
    %126 = vmatpush.msra.mxu0 %v97
    %127 = vmatpush.msra.mxu0 %v96
    %128 = vmatpush.msra.mxu0 %v95
    %129 = vmatpush.msra.mxu0 %v94
    %130 = vmatmul.f32.gmra.mxu0 %v93
    %v131 = vpop.f32.mrf.mxu0
    %v132 = vadd.f32 %v112, %v131
    %133 = vdwg.mxu0
    %v134 = vmax.f32 %v132, 0.0
    %v135 = vld [vmem:[#allocation5] sm:$0xff]
    %v136 = vld [vmem:[#allocation5 + $0x8] sm:$0xff]
    %v137 = vld [vmem:[#allocation5 + $0x10] sm:$0xff]
    %v138 = vld [vmem:[#allocation5 + $0x18] sm:$0xff]
    %v139 = vld [vmem:[#allocation5 + $0x20] sm:$0xff]
    %v140 = vld [vmem:[#allocation5 + $0x28] sm:$0xff]
    %v141 = vld [vmem:[#allocation5 + $0x30] sm:$0xff]
    %v142 = vld [vmem:[#allocation5 + $0x38] sm:$0xff]
    %v143 = vld [vmem:[#allocation5 + $0x40] sm:$0xff]
    %v144 = vld [vmem:[#allocation5 + $0x48] sm:$0xff]
    %v145 = vld [vmem:[#allocation5 + $0x50] sm:$0xff]
    %v146 = vld [vmem:[#allocation5 + $0x58] sm:$0xff]
    %v147 = vld [vmem:[#allocation5 + $0x60] sm:$0xff]
    %v148 = vld [vmem:[#allocation5 + $0x68] sm:$0xff]
    %v149 = vld [vmem:[#allocation5 + $0x70] sm:$0xff]
    %v150 = vld [vmem:[#allocation5 + $0x78] sm:$0xff]
    %v151 = vld [vmem:[%s8] sm:$0x1]
    %v153 = vperm.slane %v151, 0
    %155 = vmatpush.msra.mxu0 %v150
    %156 = vmatpush.msra.mxu0 %v149
    %157 = vmatpush.msra.mxu0 %v148
    %158 = vmatpush.msra.mxu0 %v147
    %159 = vmatpush.msra.mxu0 %v146
    %160 = vmatpush.msra.mxu0 %v145
    %161 = vmatpush.msra.mxu0 %v144
    %162 = vmatpush.msra.mxu0 %v143
    %163 = vmatpush.msra.mxu0 %v142
    %164 = vmatpush.msra.mxu0 %v141
    %165 = vmatpush.msra.mxu0 %v140
    %166 = vmatpush.msra.mxu0 %v139
    %167 = vmatpush.msra.mxu0 %v138
    %168 = vmatpush.msra.mxu0 %v137
    %169 = vmatpush.msra.mxu0 %v136
    %170 = vmatpush.msra.mxu0 %v135
    %171 = vmatmul.f32.gmra.mxu0 %v134
    %v172 = vpop.f32.mrf.mxu0
    %v173 = vadd.f32 %v153, %v172
    %174 = vdwg.mxu0
    %v175 = vmax.f32 %v173, 0.0
    %176 = vst [vmem:[#allocation7] sm:$0xff] %v175
    // Predicated region
    $region46: #{neural_net_forward.1} parent=1 // pred_check
      _
    $region47: #{neural_net_forward.1} parent=1 // pred_check_branch
      %178 = sbr.rel (0) target = $region49
    $region48: #{neural_net_forward.1} parent=1 // pred_region
      %180 = vsyncadd [#allocation4], 0
      %s182 = sshll.u32 [#allocation7], 4
      %s183 = int_to_ptr.vmem [resolvable:$true] %s182
      %s184 = sshll.u32 %s9, 4
      %s185 = int_to_ptr.hbm [resolvable:$true] %s184
      %187 = dma.vmem_to_hbm [thread:$0]  %s183, 128, %s185, [#allocation4]
    $region49: #{neural_net_forward.1} parent=1 // pred_fallthru
      _
    // Predicated region
    $region50: #{neural_net_forward.1} parent=1 // pred_check
      _
    $region51: #{neural_net_forward.1} parent=1 // pred_check_branch
      %189 = sbr.rel (0) target = $region53
    $region52: #{neural_net_forward.1} parent=1 // pred_region
      %191 = dma.done [#allocation4], 128
    $region53: #{neural_net_forward.1} parent=1 // pred_fallthru
      _
    %192 = vsyncpa [#allocation3], 1
    %193 = vsyncpa [#allocation6], 1
    %194 = vsyncpa [#allocation4], 1

</llo_original>
